<compile_context>
chip_gen: v7x
topology: tpu7x:2x2x1
jax: 0.10.0
libtpu: 0.0.40
codegen_flags: <defaults>
</compile_context>

<pallas_src>
import functools

import jax
import jax.numpy as jnp
from jax.experimental import pallas as pl
from jax.experimental.pallas import tpu as pltpu

BN_EPS = 1e-5


def _round_up(n, m=128):
    return ((n + m - 1) // m) * m


def _pad_lanes(x, target):
    pad = target - x.shape[-1]
    if pad == 0:
        return x
    return jnp.pad(x, [(0, 0)] * (x.ndim - 1) + [(0, pad)])


def ffgen_kernel(noise_ref, w1, w2, w3, w4, w5, vec_ref, out_ref, *,
                 hidden_padded, out_padded, batch):
    """Fused forward. noise/weights are bf16; vec_ref packs [g1|be1|g2|be2|g3|be3|g4|be4|b5] f32."""
    n_inv = 1.0 / float(batch)

    def bn_relu(h, g, beta):
        # One-pass batch stats (biased variance, matching PyTorch's normalization path).
        mean = jnp.sum(h, axis=0, keepdims=True) * n_inv
        ex2 = jnp.sum(h * h, axis=0, keepdims=True) * n_inv
        var = jnp.maximum(ex2 - mean * mean, 0.0)
        scale = g * jax.lax.rsqrt(var + BN_EPS)        # (1, d) — computed once per feature
        shift = beta - mean * scale
        return jnp.maximum(h * scale + shift, 0.0)     # single FMA per element + ReLU

    x = noise_ref[...]                                  # bf16 (N, d0p)
    weights = (w1, w2, w3, w4)
    off = 0
    for li, dp in enumerate(hidden_padded):
        # No bias add: it cancels exactly under batch-stat BatchNorm.
        h = jnp.dot(x, weights[li][...], preferred_element_type=jnp.float32)
        g = vec_ref[:, off:off + dp]
        off += dp
        beta = vec_ref[:, off:off + dp]
        off += dp
        x = bn_relu(h, g, beta).astype(jnp.bfloat16)

    b5 = vec_ref[:, off:off + out_padded]
    logits = jnp.dot(x, w5[...], preferred_element_type=jnp.float32) + b5
    # Sigmoid on the EUP: exp + approximate reciprocal (VPU divide avoided).
    sig = pl.reciprocal(1.0 + jnp.exp(-logits), approx=True)
    out_ref[...] = sig.astype(out_ref.dtype)


def _full_spec(shape):
    # Single grid point; every operand is one full VMEM-resident block.
    return pl.BlockSpec(shape, lambda i: tuple(0 for _ in shape))


@jax.jit
def ffgenerator_forward(noise, params):
    """params (mirroring PyTorch FFGenerator, weights pre-transposed to (in, out)):
       [w1,b1,g1,be1, w2,b2,g2,be2, w3,b3,g3,be3, w4,b4,g4,be4, w5,b5].
       Hidden biases b1..b4 are intentionally ignored (they cancel under batch-stat BN)."""
    n, z_dim = noise.shape
    w1, _, g1, be1 = params[0:4]
    w2, _, g2, be2 = params[4:8]
    w3, _, g3, be3 = params[8:12]
    w4, _, g4, be4 = params[12:16]
    w5, b5 = params[16:18]

    dims = [z_dim, w1.shape[1], w2.shape[1], w3.shape[1], w4.shape[1], w5.shape[1]]
    dp = [_round_up(d) for d in dims]                  # lane-pad every feature dim to 128*k

    # Weights: zero-pad both dims, cast to bf16 (halves weight DMA / VMEM footprint;
    # MXU bf16 rate is 2x f32).  In a real deployment this packing is done once, offline.
    def prep_w(w, ip, op):
        w = jnp.pad(w, ((0, ip - w.shape[0]), (0, op - w.shape[1])))
        return w.astype(jnp.bfloat16)

    W = [prep_w(w, dp[i], dp[i + 1]) for i, w in enumerate([w1, w2, w3, w4, w5])]

    # Pack gamma/beta (x4) and the final bias into ONE lane-aligned f32 vector -> one DMA.
    segs = []
    for g, be, d_out in ((g1, be1, dp[1]), (g2, be2, dp[2]), (g3, be3, dp[3]), (g4, be4, dp[4])):
        segs.append(_pad_lanes(g.astype(jnp.float32), d_out))
        segs.append(_pad_lanes(be.astype(jnp.float32), d_out))
    segs.append(_pad_lanes(b5.astype(jnp.float32), dp[5]))
    vec = jnp.concatenate(segs, axis=1)

    noise_p = _pad_lanes(noise.astype(jnp.float32), dp[0]).astype(jnp.bfloat16)

    kernel = functools.partial(
        ffgen_kernel,
        hidden_padded=tuple(dp[1:5]),
        out_padded=dp[5],
        batch=n,
    )

    out_padded = pl.pallas_call(
        kernel,
        out_shape=jax.ShapeDtypeStruct((n, dp[5]), jnp.float32),
        grid=(1,),
        in_specs=[_full_spec(noise_p.shape)]
                 + [_full_spec(w.shape) for w in W]
                 + [_full_spec(vec.shape)],
        out_specs=_full_spec((n, dp[5])),
        compiler_params=pltpu.CompilerParams(
            dimension_semantics=("arbitrary",),
            vmem_limit_bytes=32 * 1024 * 1024,
        ),
    )(noise_p, *W, vec)

    return out_padded[:, :dims[5]]                     # drop lane padding outside the kernel


def init_params(key, z_dim, im_dim, hidden_dim):
    """Parameters mirroring FFGenerator's layers (Linear weights pre-transposed to (in, out)).
    Hidden Linear biases are created (PyTorch has them) even though the kernel drops them."""
    dims = [z_dim, hidden_dim, hidden_dim * 2, hidden_dim * 4, hidden_dim * 8, im_dim]
    params = []
    keys = jax.random.split(key, 2 * (len(dims) - 1))
    for li in range(len(dims) - 1):
        fan_in, fan_out = dims[li], dims[li + 1]
        bound = 1.0 / jnp.sqrt(float(fan_in))
        w = jax.random.uniform(keys[2 * li], (fan_in, fan_out),
                               minval=-bound, maxval=bound, dtype=jnp.float32)
        b = jax.random.uniform(keys[2 * li + 1], (1, fan_out),
                               minval=-bound, maxval=bound, dtype=jnp.float32)
        params.extend([w, b])
        if li < len(dims) - 2:                         # BN only on the 4 hidden blocks
            params.append(jnp.ones((1, fan_out), jnp.float32))    # gamma
            params.append(jnp.zeros((1, fan_out), jnp.float32))   # beta
    return params


def reference_forward(noise, params):
    """Pure-JAX f32 reference with full PyTorch semantics (incl. the redundant pre-BN biases
    and two-pass biased variance)."""
    x = noise
    for li in range(4):
        w, b, g, be = params[4 * li: 4 * li + 4]
        h = x @ w + b
        mean = jnp.mean(h, axis=0, keepdims=True)
        var = jnp.mean((h - mean) ** 2, axis=0, keepdims=True)
        h = (h - mean) / jnp.sqrt(var + BN_EPS) * g + be
        x = jnp.maximum(h, 0.0)
    w, b = params[16], params[17]
    return jax.nn.sigmoid(x @ w + b)


if __name__ == "__main__":
    # Small shapes consistent with FFGenerator.forward: noise (n_samples, z_dim).
    z_dim, im_dim, hidden_dim = 8, 64, 32
    batch = 8

    key = jax.random.PRNGKey(0)
    k_noise, k_params = jax.random.split(key)
    noise = jax.random.normal(k_noise, (batch, z_dim), dtype=jnp.float32)
    params = init_params(k_params, z_dim, im_dim, hidden_dim)

    out = ffgenerator_forward(noise, params)
    out = jax.block_until_ready(out)

    ref = reference_forward(noise, params)
    assert out.shape == (batch, im_dim)
    max_err = float(jnp.max(jnp.abs(out - ref)))
    # bf16 MXU inputs + approx EUP reciprocal -> relaxed tolerance vs f32 reference.
    assert max_err < 5e-2, f"mismatch vs JAX reference, max |err| = {max_err}"

    print("KERNEL_OK")
</pallas_src>

<mosaic_0001>
module attributes {stable_mosaic.version = 11 : i64} {
  func.func @ffgen_kernel(%arg0: i32, %arg1: memref<8x128xbf16, #tpu.memory_space<vmem>>, %arg2: memref<128x128xbf16, #tpu.memory_space<vmem>>, %arg3: memref<128x128xbf16, #tpu.memory_space<vmem>>, %arg4: memref<128x128xbf16, #tpu.memory_space<vmem>>, %arg5: memref<128x256xbf16, #tpu.memory_space<vmem>>, %arg6: memref<256x128xbf16, #tpu.memory_space<vmem>>, %arg7: memref<1x1408xf32, #tpu.memory_space<vmem>>, %arg8: memref<8x128xf32, #tpu.memory_space<vmem>>) attributes {dimension_semantics = [#tpu.dimension_semantics<arbitrary>], iteration_bounds = array<i64: 1>, scalar_prefetch = 0 : i64, scratch_operands = 0 : i64, tpu.core_type = #tpu.core_type<tc>, window_params = [{pipeline_mode = #tpu.pipeline_mode<synchronous>, transform_indices = @transform_0, window_bounds = array<i64: 8, 128>}, {pipeline_mode = #tpu.pipeline_mode<synchronous>, transform_indices = @transform_1, window_bounds = array<i64: 128, 128>}, {pipeline_mode = #tpu.pipeline_mode<synchronous>, transform_indices = @transform_2, window_bounds = array<i64: 128, 128>}, {pipeline_mode = #tpu.pipeline_mode<synchronous>, transform_indices = @transform_3, window_bounds = array<i64: 128, 128>}, {pipeline_mode = #tpu.pipeline_mode<synchronous>, transform_indices = @transform_4, window_bounds = array<i64: 128, 256>}, {pipeline_mode = #tpu.pipeline_mode<synchronous>, transform_indices = @transform_5, window_bounds = array<i64: 256, 128>}, {pipeline_mode = #tpu.pipeline_mode<synchronous>, transform_indices = @transform_6, window_bounds = array<i64: 1, 1408>}, {pipeline_mode = #tpu.pipeline_mode<synchronous>, transform_indices = @transform_7, window_bounds = array<i64: 8, 128>}]} {
    %c0 = arith.constant 0 : index
    %c0_0 = arith.constant 0 : index
    %0 = vector.load %arg1[%c0, %c0_0] : memref<8x128xbf16, #tpu.memory_space<vmem>>, vector<8x128xbf16>
    %c0_1 = arith.constant 0 : index
    %c0_2 = arith.constant 0 : index
    %1 = vector.load %arg2[%c0_1, %c0_2] : memref<128x128xbf16, #tpu.memory_space<vmem>>, vector<128x128xbf16>
    %cst = arith.constant dense<0.000000e+00> : vector<8x128xf32>
    %2 = tpu.matmul %0, %1, %cst {dimension_numbers = #tpu.dot_dimension_numbers<[1], [0], [0], [1], [0, 0, 1, 1], [], []>} : vector<8x128xbf16>, vector<128x128xbf16>, vector<8x128xf32> -> vector<8x128xf32>
    %c0_3 = arith.constant 0 : index
    %c0_4 = arith.constant 0 : index
    %3 = vector.load %arg7[%c0_3, %c0_4] : memref<1x1408xf32, #tpu.memory_space<vmem>>, vector<1x128xf32>
    %c0_5 = arith.constant 0 : index
    %c128 = arith.constant 128 : index
    %4 = vector.load %arg7[%c0_5, %c128] : memref<1x1408xf32, #tpu.memory_space<vmem>>, vector<1x128xf32>
    %cst_6 = arith.constant dense<0.000000e+00> : vector<128xf32>
    %5 = vector.multi_reduction <add>, %2, %cst_6 [0] : vector<8x128xf32> to vector<128xf32>
    %6 = vector.shape_cast %5 : vector<128xf32> to vector<1x128xf32>
    %cst_7 = arith.constant 1.250000e-01 : f32
    %7 = vector.broadcast %cst_7 : f32 to vector<1x128xf32>
    %8 = arith.mulf %6, %7 : vector<1x128xf32>
    %9 = arith.mulf %2, %2 : vector<8x128xf32>
    %cst_8 = arith.constant dense<0.000000e+00> : vector<128xf32>
    %10 = vector.multi_reduction <add>, %9, %cst_8 [0] : vector<8x128xf32> to vector<128xf32>
    %11 = vector.shape_cast %10 : vector<128xf32> to vector<1x128xf32>
    %cst_9 = arith.constant 1.250000e-01 : f32
    %12 = vector.broadcast %cst_9 : f32 to vector<1x128xf32>
    %13 = arith.mulf %11, %12 : vector<1x128xf32>
    %14 = arith.mulf %8, %8 : vector<1x128xf32>
    %15 = arith.subf %13, %14 : vector<1x128xf32>
    %cst_10 = arith.constant 0.000000e+00 : f32
    %16 = vector.broadcast %cst_10 : f32 to vector<1x128xf32>
    %17 = arith.maximumf %15, %16 : vector<1x128xf32>
    %cst_11 = arith.constant 9.99999974E-6 : f32
    %18 = vector.broadcast %cst_11 : f32 to vector<1x128xf32>
    %19 = arith.addf %17, %18 : vector<1x128xf32>
    %20 = math.rsqrt %19 : vector<1x128xf32>
    %21 = arith.mulf %3, %20 : vector<1x128xf32>
    %22 = arith.mulf %8, %21 : vector<1x128xf32>
    %23 = arith.subf %4, %22 : vector<1x128xf32>
    %24 = vector.broadcast %21 : vector<1x128xf32> to vector<8x128xf32>
    %25 = arith.mulf %2, %24 : vector<8x128xf32>
    %26 = vector.broadcast %23 : vector<1x128xf32> to vector<8x128xf32>
    %27 = arith.addf %25, %26 : vector<8x128xf32>
    %cst_12 = arith.constant 0.000000e+00 : f32
    %28 = vector.broadcast %cst_12 : f32 to vector<8x128xf32>
    %29 = arith.maximumf %27, %28 : vector<8x128xf32>
    %30 = arith.truncf %29 : vector<8x128xf32> to vector<8x128xbf16>
    %c0_13 = arith.constant 0 : index
    %c0_14 = arith.constant 0 : index
    %31 = vector.load %arg3[%c0_13, %c0_14] : memref<128x128xbf16, #tpu.memory_space<vmem>>, vector<128x128xbf16>
    %cst_15 = arith.constant dense<0.000000e+00> : vector<8x128xf32>
    %32 = tpu.matmul %30, %31, %cst_15 {dimension_numbers = #tpu.dot_dimension_numbers<[1], [0], [0], [1], [0, 0, 1, 1], [], []>} : vector<8x128xbf16>, vector<128x128xbf16>, vector<8x128xf32> -> vector<8x128xf32>
    %c0_16 = arith.constant 0 : index
    %c256 = arith.constant 256 : index
    %33 = vector.load %arg7[%c0_16, %c256] : memref<1x1408xf32, #tpu.memory_space<vmem>>, vector<1x128xf32>
    %c0_17 = arith.constant 0 : index
    %c384 = arith.constant 384 : index
    %34 = vector.load %arg7[%c0_17, %c384] : memref<1x1408xf32, #tpu.memory_space<vmem>>, vector<1x128xf32>
    %cst_18 = arith.constant dense<0.000000e+00> : vector<128xf32>
    %35 = vector.multi_reduction <add>, %32, %cst_18 [0] : vector<8x128xf32> to vector<128xf32>
    %36 = vector.shape_cast %35 : vector<128xf32> to vector<1x128xf32>
    %cst_19 = arith.constant 1.250000e-01 : f32
    %37 = vector.broadcast %cst_19 : f32 to vector<1x128xf32>
    %38 = arith.mulf %36, %37 : vector<1x128xf32>
    %39 = arith.mulf %32, %32 : vector<8x128xf32>
    %cst_20 = arith.constant dense<0.000000e+00> : vector<128xf32>
    %40 = vector.multi_reduction <add>, %39, %cst_20 [0] : vector<8x128xf32> to vector<128xf32>
    %41 = vector.shape_cast %40 : vector<128xf32> to vector<1x128xf32>
    %cst_21 = arith.constant 1.250000e-01 : f32
    %42 = vector.broadcast %cst_21 : f32 to vector<1x128xf32>
    %43 = arith.mulf %41, %42 : vector<1x128xf32>
    %44 = arith.mulf %38, %38 : vector<1x128xf32>
    %45 = arith.subf %43, %44 : vector<1x128xf32>
    %cst_22 = arith.constant 0.000000e+00 : f32
    %46 = vector.broadcast %cst_22 : f32 to vector<1x128xf32>
    %47 = arith.maximumf %45, %46 : vector<1x128xf32>
    %cst_23 = arith.constant 9.99999974E-6 : f32
    %48 = vector.broadcast %cst_23 : f32 to vector<1x128xf32>
    %49 = arith.addf %47, %48 : vector<1x128xf32>
    %50 = math.rsqrt %49 : vector<1x128xf32>
    %51 = arith.mulf %33, %50 : vector<1x128xf32>
    %52 = arith.mulf %38, %51 : vector<1x128xf32>
    %53 = arith.subf %34, %52 : vector<1x128xf32>
    %54 = vector.broadcast %51 : vector<1x128xf32> to vector<8x128xf32>
    %55 = arith.mulf %32, %54 : vector<8x128xf32>
    %56 = vector.broadcast %53 : vector<1x128xf32> to vector<8x128xf32>
    %57 = arith.addf %55, %56 : vector<8x128xf32>
    %cst_24 = arith.constant 0.000000e+00 : f32
    %58 = vector.broadcast %cst_24 : f32 to vector<8x128xf32>
    %59 = arith.maximumf %57, %58 : vector<8x128xf32>
    %60 = arith.truncf %59 : vector<8x128xf32> to vector<8x128xbf16>
    %c0_25 = arith.constant 0 : index
    %c0_26 = arith.constant 0 : index
    %61 = vector.load %arg4[%c0_25, %c0_26] : memref<128x128xbf16, #tpu.memory_space<vmem>>, vector<128x128xbf16>
    %cst_27 = arith.constant dense<0.000000e+00> : vector<8x128xf32>
    %62 = tpu.matmul %60, %61, %cst_27 {dimension_numbers = #tpu.dot_dimension_numbers<[1], [0], [0], [1], [0, 0, 1, 1], [], []>} : vector<8x128xbf16>, vector<128x128xbf16>, vector<8x128xf32> -> vector<8x128xf32>
    %c0_28 = arith.constant 0 : index
    %c512 = arith.constant 512 : index
    %63 = vector.load %arg7[%c0_28, %c512] : memref<1x1408xf32, #tpu.memory_space<vmem>>, vector<1x128xf32>
    %c0_29 = arith.constant 0 : index
    %c640 = arith.constant 640 : index
    %64 = vector.load %arg7[%c0_29, %c640] : memref<1x1408xf32, #tpu.memory_space<vmem>>, vector<1x128xf32>
    %cst_30 = arith.constant dense<0.000000e+00> : vector<128xf32>
    %65 = vector.multi_reduction <add>, %62, %cst_30 [0] : vector<8x128xf32> to vector<128xf32>
    %66 = vector.shape_cast %65 : vector<128xf32> to vector<1x128xf32>
    %cst_31 = arith.constant 1.250000e-01 : f32
    %67 = vector.broadcast %cst_31 : f32 to vector<1x128xf32>
    %68 = arith.mulf %66, %67 : vector<1x128xf32>
    %69 = arith.mulf %62, %62 : vector<8x128xf32>
    %cst_32 = arith.constant dense<0.000000e+00> : vector<128xf32>
    %70 = vector.multi_reduction <add>, %69, %cst_32 [0] : vector<8x128xf32> to vector<128xf32>
    %71 = vector.shape_cast %70 : vector<128xf32> to vector<1x128xf32>
    %cst_33 = arith.constant 1.250000e-01 : f32
    %72 = vector.broadcast %cst_33 : f32 to vector<1x128xf32>
    %73 = arith.mulf %71, %72 : vector<1x128xf32>
    %74 = arith.mulf %68, %68 : vector<1x128xf32>
    %75 = arith.subf %73, %74 : vector<1x128xf32>
    %cst_34 = arith.constant 0.000000e+00 : f32
    %76 = vector.broadcast %cst_34 : f32 to vector<1x128xf32>
    %77 = arith.maximumf %75, %76 : vector<1x128xf32>
    %cst_35 = arith.constant 9.99999974E-6 : f32
    %78 = vector.broadcast %cst_35 : f32 to vector<1x128xf32>
    %79 = arith.addf %77, %78 : vector<1x128xf32>
    %80 = math.rsqrt %79 : vector<1x128xf32>
    %81 = arith.mulf %63, %80 : vector<1x128xf32>
    %82 = arith.mulf %68, %81 : vector<1x128xf32>
    %83 = arith.subf %64, %82 : vector<1x128xf32>
    %84 = vector.broadcast %81 : vector<1x128xf32> to vector<8x128xf32>
    %85 = arith.mulf %62, %84 : vector<8x128xf32>
    %86 = vector.broadcast %83 : vector<1x128xf32> to vector<8x128xf32>
    %87 = arith.addf %85, %86 : vector<8x128xf32>
    %cst_36 = arith.constant 0.000000e+00 : f32
    %88 = vector.broadcast %cst_36 : f32 to vector<8x128xf32>
    %89 = arith.maximumf %87, %88 : vector<8x128xf32>
    %90 = arith.truncf %89 : vector<8x128xf32> to vector<8x128xbf16>
    %c0_37 = arith.constant 0 : index
    %c0_38 = arith.constant 0 : index
    %91 = vector.load %arg5[%c0_37, %c0_38] : memref<128x256xbf16, #tpu.memory_space<vmem>>, vector<128x256xbf16>
    %cst_39 = arith.constant dense<0.000000e+00> : vector<8x256xf32>
    %92 = tpu.matmul %90, %91, %cst_39 {dimension_numbers = #tpu.dot_dimension_numbers<[1], [0], [0], [1], [0, 0, 1, 1], [], []>} : vector<8x128xbf16>, vector<128x256xbf16>, vector<8x256xf32> -> vector<8x256xf32>
    %c0_40 = arith.constant 0 : index
    %c768 = arith.constant 768 : index
    %93 = vector.load %arg7[%c0_40, %c768] : memref<1x1408xf32, #tpu.memory_space<vmem>>, vector<1x256xf32>
    %c0_41 = arith.constant 0 : index
    %c1024 = arith.constant 1024 : index
    %94 = vector.load %arg7[%c0_41, %c1024] : memref<1x1408xf32, #tpu.memory_space<vmem>>, vector<1x256xf32>
    %cst_42 = arith.constant dense<0.000000e+00> : vector<256xf32>
    %95 = vector.multi_reduction <add>, %92, %cst_42 [0] : vector<8x256xf32> to vector<256xf32>
    %96 = vector.shape_cast %95 : vector<256xf32> to vector<1x256xf32>
    %cst_43 = arith.constant 1.250000e-01 : f32
    %97 = vector.broadcast %cst_43 : f32 to vector<1x256xf32>
    %98 = arith.mulf %96, %97 : vector<1x256xf32>
    %99 = arith.mulf %92, %92 : vector<8x256xf32>
    %cst_44 = arith.constant dense<0.000000e+00> : vector<256xf32>
    %100 = vector.multi_reduction <add>, %99, %cst_44 [0] : vector<8x256xf32> to vector<256xf32>
    %101 = vector.shape_cast %100 : vector<256xf32> to vector<1x256xf32>
    %cst_45 = arith.constant 1.250000e-01 : f32
    %102 = vector.broadcast %cst_45 : f32 to vector<1x256xf32>
    %103 = arith.mulf %101, %102 : vector<1x256xf32>
    %104 = arith.mulf %98, %98 : vector<1x256xf32>
    %105 = arith.subf %103, %104 : vector<1x256xf32>
    %cst_46 = arith.constant 0.000000e+00 : f32
    %106 = vector.broadcast %cst_46 : f32 to vector<1x256xf32>
    %107 = arith.maximumf %105, %106 : vector<1x256xf32>
    %cst_47 = arith.constant 9.99999974E-6 : f32
    %108 = vector.broadcast %cst_47 : f32 to vector<1x256xf32>
    %109 = arith.addf %107, %108 : vector<1x256xf32>
    %110 = math.rsqrt %109 : vector<1x256xf32>
    %111 = arith.mulf %93, %110 : vector<1x256xf32>
    %112 = arith.mulf %98, %111 : vector<1x256xf32>
    %113 = arith.subf %94, %112 : vector<1x256xf32>
    %114 = vector.broadcast %111 : vector<1x256xf32> to vector<8x256xf32>
    %115 = arith.mulf %92, %114 : vector<8x256xf32>
    %116 = vector.broadcast %113 : vector<1x256xf32> to vector<8x256xf32>
    %117 = arith.addf %115, %116 : vector<8x256xf32>
    %cst_48 = arith.constant 0.000000e+00 : f32
    %118 = vector.broadcast %cst_48 : f32 to vector<8x256xf32>
    %119 = arith.maximumf %117, %118 : vector<8x256xf32>
    %120 = arith.truncf %119 : vector<8x256xf32> to vector<8x256xbf16>
    %c0_49 = arith.constant 0 : index
    %c1280 = arith.constant 1280 : index
    %121 = vector.load %arg7[%c0_49, %c1280] : memref<1x1408xf32, #tpu.memory_space<vmem>>, vector<1x128xf32>
    %c0_50 = arith.constant 0 : index
    %c0_51 = arith.constant 0 : index
    %122 = vector.load %arg6[%c0_50, %c0_51] : memref<256x128xbf16, #tpu.memory_space<vmem>>, vector<256x128xbf16>
    %cst_52 = arith.constant dense<0.000000e+00> : vector<8x128xf32>
    %123 = tpu.matmul %120, %122, %cst_52 {dimension_numbers = #tpu.dot_dimension_numbers<[1], [0], [0], [1], [0, 0, 1, 1], [], []>} : vector<8x256xbf16>, vector<256x128xbf16>, vector<8x128xf32> -> vector<8x128xf32>
    %124 = vector.broadcast %121 : vector<1x128xf32> to vector<8x128xf32>
    %125 = arith.addf %123, %124 : vector<8x128xf32>
    %cst_53 = arith.constant 0.000000e+00 : f32
    %126 = vector.broadcast %cst_53 : f32 to vector<8x128xf32>
    %127 = arith.subf %126, %125 : vector<8x128xf32>
    %128 = math.exp %127 : vector<8x128xf32>
    %cst_54 = arith.constant 1.000000e+00 : f32
    %129 = vector.broadcast %cst_54 : f32 to vector<8x128xf32>
    %130 = arith.addf %129, %128 : vector<8x128xf32>
    %131 = tpu.reciprocal %130 {approx = true} : vector<8x128xf32> -> vector<8x128xf32>
    %c0_55 = arith.constant 0 : index
    %c0_56 = arith.constant 0 : index
    %132 = vector.load %arg8[%c0_55, %c0_56] : memref<8x128xf32, #tpu.memory_space<vmem>>, vector<8x128xf32>
    tpu.vector_store %arg8[%c0_55, %c0_56], %131 {strides = array<i32>} : memref<8x128xf32, #tpu.memory_space<vmem>>, vector<8x128xf32>,
    return
  }
  func.func @transform_0(%arg0: i32) -> (i32, i32) {
    %c0_i32 = arith.constant 0 : i32
    %c0_i32_0 = arith.constant 0 : i32
    %c0_i32_1 = arith.constant 0 : i32
    return %c0_i32, %c0_i32_0 : i32, i32
  }
  func.func @transform_1(%arg0: i32) -> (i32, i32) {
    %c0_i32 = arith.constant 0 : i32
    %c0_i32_0 = arith.constant 0 : i32
    %c0_i32_1 = arith.constant 0 : i32
    return %c0_i32, %c0_i32_0 : i32, i32
  }
  func.func @transform_2(%arg0: i32) -> (i32, i32) {
    %c0_i32 = arith.constant 0 : i32
    %c0_i32_0 = arith.constant 0 : i32
    %c0_i32_1 = arith.constant 0 : i32
    return %c0_i32, %c0_i32_0 : i32, i32
  }
  func.func @transform_3(%arg0: i32) -> (i32, i32) {
    %c0_i32 = arith.constant 0 : i32
    %c0_i32_0 = arith.constant 0 : i32
    %c0_i32_1 = arith.constant 0 : i32
    return %c0_i32, %c0_i32_0 : i32, i32
  }
  func.func @transform_4(%arg0: i32) -> (i32, i32) {
    %c0_i32 = arith.constant 0 : i32
    %c0_i32_0 = arith.constant 0 : i32
    %c0_i32_1 = arith.constant 0 : i32
    return %c0_i32, %c0_i32_0 : i32, i32
  }
  func.func @transform_5(%arg0: i32) -> (i32, i32) {
    %c0_i32 = arith.constant 0 : i32
    %c0_i32_0 = arith.constant 0 : i32
    %c0_i32_1 = arith.constant 0 : i32
    return %c0_i32, %c0_i32_0 : i32, i32
  }
  func.func @transform_6(%arg0: i32) -> (i32, i32) {
    %c0_i32 = arith.constant 0 : i32
    %c0_i32_0 = arith.constant 0 : i32
    %c0_i32_1 = arith.constant 0 : i32
    return %c0_i32, %c0_i32_0 : i32, i32
  }
  func.func @transform_7(%arg0: i32) -> (i32, i32) {
    %c0_i32 = arith.constant 0 : i32
    %c0_i32_0 = arith.constant 0 : i32
    %c0_i32_1 = arith.constant 0 : i32
    return %c0_i32, %c0_i32_0 : i32, i32
  }
}

</mosaic_0001>

<llo_original>
// kernel: ffgenerator_forward.1
$region0: #{ffgenerator_forward.1}
  #allocation0 [shape = 'u32[]', space=smem, size = 0x4, offset = 0x4, fixed_abs, tag = 'smem constant byte address 0x4 - core index']
  #allocation1 [shape = 'u32[144,128]{1,0:T(1,128)}', space=vmem, size = 0x12000, scoped, tag = 'internal scratch']
  %s0 = inlined_call_operand.vmem [shape: bf16[8,128], index: 0, kind: input, shape index: {}]
  %s1 = inlined_call_operand.vmem [shape: bf16[128,128], index: 1, kind: input, shape index: {}]
  %s2 = inlined_call_operand.vmem [shape: bf16[128,128], index: 2, kind: input, shape index: {}]
  %s3 = inlined_call_operand.vmem [shape: bf16[128,128], index: 3, kind: input, shape index: {}]
  %s4 = inlined_call_operand.vmem [shape: bf16[128,256], index: 4, kind: input, shape index: {}]
  %s5 = inlined_call_operand.vmem [shape: bf16[256,128], index: 5, kind: input, shape index: {}]
  %s6 = inlined_call_operand.vmem [shape: f32[1,1408], index: 6, kind: input, shape index: {}]
  %s7 = inlined_call_operand.hbm [shape: f32[8,128], index: 7, kind: output, shape index: {}]
  %s8 = sld [smem:[#allocation0]]
  $region38: #{ffgenerator_forward.1} parent=0
    _
  %s10 = ssub.s32 1, %s8
  %s11 = scalar_select 0, %s10, %s8
  $region1: #{ffgenerator_forward.1} parent=0
    #allocation2 [shape = 'u8[4096]{0}', space=vmem, size = 0x1000, scoped, tag = 'output window, operand 0, single buffered']
    #allocation3 [shape = 's32[1]{0}', space=sflag, size = 0x4, scoped, tag = 'scoped memory for ffgenerator_forward.1']
    %12 = vsyncpa [#allocation3], 0
    // Predicated region
    $region2: #{ffgenerator_forward.1} parent=1 // pred_check
      _
    $region3: #{ffgenerator_forward.1} parent=1 // pred_check_branch
      %14 = sbr.rel (0) target = $region5
    $region4: #{ffgenerator_forward.1} parent=1 // pred_region
      _
    $region5: #{ffgenerator_forward.1} parent=1 // pred_fallthru
      _
    // Predicated region
    $region6: #{ffgenerator_forward.1} parent=1 // pred_check
      _
    $region7: #{ffgenerator_forward.1} parent=1 // pred_check_branch
      %16 = sbr.rel (0) target = $region9
    $region8: #{ffgenerator_forward.1} parent=1 // pred_region
      _
    $region9: #{ffgenerator_forward.1} parent=1 // pred_fallthru
      _
    // Predicated region
    $region10: #{ffgenerator_forward.1} parent=1 // pred_check
      _
    $region11: #{ffgenerator_forward.1} parent=1 // pred_check_branch
      %18 = sbr.rel (0) target = $region13
    $region12: #{ffgenerator_forward.1} parent=1 // pred_region
      _
    $region13: #{ffgenerator_forward.1} parent=1 // pred_fallthru
      _
    // Predicated region
    $region14: #{ffgenerator_forward.1} parent=1 // pred_check
      _
    $region15: #{ffgenerator_forward.1} parent=1 // pred_check_branch
      %20 = sbr.rel (0) target = $region17
    $region16: #{ffgenerator_forward.1} parent=1 // pred_region
      _
    $region17: #{ffgenerator_forward.1} parent=1 // pred_fallthru
      _
    // Predicated region
    $region18: #{ffgenerator_forward.1} parent=1 // pred_check
      _
    $region19: #{ffgenerator_forward.1} parent=1 // pred_check_branch
      %22 = sbr.rel (0) target = $region21
    $region20: #{ffgenerator_forward.1} parent=1 // pred_region
      _
    $region21: #{ffgenerator_forward.1} parent=1 // pred_fallthru
      _
    // Predicated region
    $region22: #{ffgenerator_forward.1} parent=1 // pred_check
      _
    $region23: #{ffgenerator_forward.1} parent=1 // pred_check_branch
      %24 = sbr.rel (0) target = $region25
    $region24: #{ffgenerator_forward.1} parent=1 // pred_region
      _
    $region25: #{ffgenerator_forward.1} parent=1 // pred_fallthru
      _
    // Predicated region
    $region26: #{ffgenerator_forward.1} parent=1 // pred_check
      _
    $region27: #{ffgenerator_forward.1} parent=1 // pred_check_branch
      %26 = sbr.rel (0) target = $region29
    $region28: #{ffgenerator_forward.1} parent=1 // pred_region
      _
    $region29: #{ffgenerator_forward.1} parent=1 // pred_fallthru
      _
    %v28 = vld [vmem:[%s0] sm:$0xf]
    %v29 = vld [vmem:[%s1] sm:$0xf]
    %v30 = vld [vmem:[%s1 + $0x4] sm:$0xf]
    %v31 = vld [vmem:[%s1 + $0x8] sm:$0xf]
    %v32 = vld [vmem:[%s1 + $0xc] sm:$0xf]
    %v33 = vld [vmem:[%s1 + $0x10] sm:$0xf]
    %v34 = vld [vmem:[%s1 + $0x14] sm:$0xf]
    %v35 = vld [vmem:[%s1 + $0x18] sm:$0xf]
    %v36 = vld [vmem:[%s1 + $0x1c] sm:$0xf]
    %v37 = vld [vmem:[%s1 + $0x20] sm:$0xf]
    %v38 = vld [vmem:[%s1 + $0x24] sm:$0xf]
    %v39 = vld [vmem:[%s1 + $0x28] sm:$0xf]
    %v40 = vld [vmem:[%s1 + $0x2c] sm:$0xf]
    %v41 = vld [vmem:[%s1 + $0x30] sm:$0xf]
    %v42 = vld [vmem:[%s1 + $0x34] sm:$0xf]
    %v43 = vld [vmem:[%s1 + $0x38] sm:$0xf]
    %v44 = vld [vmem:[%s1 + $0x3c] sm:$0xf]
    %v61 = vunpack.c.l.b16 %v29
    %v62 = vunpack.c.l.b16 %v30
    %v63 = vunpack.c.l.b16 %v31
    %v64 = vunpack.c.l.b16 %v32
    %v65 = vunpack.c.l.b16 %v33
    %v66 = vunpack.c.l.b16 %v34
    %v67 = vunpack.c.l.b16 %v35
    %v68 = vunpack.c.l.b16 %v36
    %v69 = vunpack.c.l.b16 %v37
    %v70 = vunpack.c.l.b16 %v38
    %v71 = vunpack.c.l.b16 %v39
    %v72 = vunpack.c.l.b16 %v40
    %v73 = vunpack.c.l.b16 %v41
    %v74 = vunpack.c.l.b16 %v42
    %v75 = vunpack.c.l.b16 %v43
    %v76 = vunpack.c.l.b16 %v44
    %v77 = vpack.c.b16 %v62, %v61
    %v78 = vpack.c.b16 %v64, %v63
    %v79 = vpack.c.b16 %v66, %v65
    %v80 = vpack.c.b16 %v68, %v67
    %v81 = vpack.c.b16 %v70, %v69
    %v82 = vpack.c.b16 %v72, %v71
    %v83 = vpack.c.b16 %v74, %v73
    %v84 = vpack.c.b16 %v76, %v75
    %93 = vmatprep.subr.bf16.mxu0 0
    %94 = vmatpush1.bf16.msra.mxu0 %v77
    %95 = vmatprep.subr.bf16.mxu0 0
    %96 = vmatpush1.bf16.msra.mxu0 %v78
    %97 = vmatprep.subr.bf16.mxu0 0
    %98 = vmatpush1.bf16.msra.mxu0 %v79
    %99 = vmatprep.subr.bf16.mxu0 0
    %100 = vmatpush1.bf16.msra.mxu0 %v80
    %101 = vmatprep.subr.bf16.mxu0 0
    %102 = vmatpush1.bf16.msra.mxu0 %v81
    %103 = vmatprep.subr.bf16.mxu0 0
    %104 = vmatpush1.bf16.msra.mxu0 %v82
    %105 = vmatprep.subr.bf16.mxu0 0
    %106 = vmatpush1.bf16.msra.mxu0 %v83
    %107 = vmatprep.subr.bf16.mxu0 0
    %108 = vmatpush1.bf16.msra.mxu0 %v84
    %109 = vmatprep.subr.bf16.mxu0 0
    %110 = vmatpush1.bf16.msra.mxu0 0
    %111 = vmatprep.subr.bf16.mxu0 0
    %112 = vmatpush1.bf16.msra.mxu0 0
    %113 = vmatprep.subr.bf16.mxu0 0
    %114 = vmatpush1.bf16.msra.mxu0 0
    %115 = vmatprep.subr.bf16.mxu0 0
    %116 = vmatpush1.bf16.msra.mxu0 0
    %117 = vmatprep.subr.bf16.mxu0 0
    %118 = vmatpush1.bf16.msra.mxu0 0
    %119 = vmatprep.subr.bf16.mxu0 0
    %120 = vmatpush1.bf16.msra.mxu0 0
    %121 = vmatprep.subr.bf16.mxu0 0
    %122 = vmatpush1.bf16.msra.mxu0 0
    %123 = vmatprep.subr.bf16.mxu0 0
    %124 = vmatpush1.bf16.msra.mxu0 0
    %125 = vmatprep.mubr.bf16.mxu0 0
    %126 = vmatmul.mubr.bf16.gmra.mrb[0].mxu0 %v28
    %v127 = vpop.f32.mrb[0].mxu0
    %v128 = vadd.f32 0.0, %v127
    %v129 = vpop.f32.mrb[0].mxu0
    %v130 = vpop.f32.mrb[0].mxu0
    %v131 = vpop.f32.mrb[0].mxu0
    %132 = vdwg.mxu0
    %v133 = vld [vmem:[%s6] sm:$0x1]
    %v134 = vld [vmem:[%s6 + $0x1] sm:$0x1]
    %v135 = vrot.slane %v128, 4
    %v136 = vadd.f32 %v128, %v135
    %v137 = vrot.slane %v136, 2
    %v138 = vadd.f32 %v136, %v137
    %v139 = vrot.slane %v138, 1
    %v140 = vadd.f32 %v138, %v139
    %v141 = vmul.f32 %v140, 0.125
    %v142 = vmul.f32 %v128, %v128
    %v143 = vrot.slane %v142, 4
    %v144 = vadd.f32 %v142, %v143
    %v145 = vrot.slane %v144, 2
    %v146 = vadd.f32 %v144, %v145
    %v147 = vrot.slane %v146, 1
    %v148 = vadd.f32 %v146, %v147
    %v149 = vmul.f32 %v148, 0.125
    %v150 = vmul.f32 %v141, %v141
    %v151 = vsub.f32 %v149, %v150
    %v152 = vmax.f32 %v151, 0.0
    %v153 = vadd.f32 %v152, 1e-05
    %v154 = vrsqrt.pop %v153
    %v155 = vmul.f32 %v133, %v154
    %v156 = vmul.f32 %v141, %v155
    %v157 = vsub.f32 %v134, %v156
    %v159 = vlaneseq
    %v160 = vshrl.u32 %v159, 7
    %v161 = vsub.s32 0, %v160
    %v162 = vrot.slane %v155, %v161
    %v164 = vmul.f32 %v128, %v162
    %v166 = vlaneseq
    %v167 = vshrl.u32 %v166, 7
    %v168 = vsub.s32 0, %v167
    %v169 = vrot.slane %v157, %v168
    %v171 = vadd.f32 %v164, %v169
    %v172 = vmax.f32 %v171, 0.0
    %v173 = vpack.c.bf16 %v172, %v172
    %v174 = vld [vmem:[%s2] sm:$0xf]
    %v175 = vld [vmem:[%s2 + $0x4] sm:$0xf]
    %v176 = vld [vmem:[%s2 + $0x8] sm:$0xf]
    %v177 = vld [vmem:[%s2 + $0xc] sm:$0xf]
    %v178 = vld [vmem:[%s2 + $0x10] sm:$0xf]
    %v179 = vld [vmem:[%s2 + $0x14] sm:$0xf]
    %v180 = vld [vmem:[%s2 + $0x18] sm:$0xf]
    %v181 = vld [vmem:[%s2 + $0x1c] sm:$0xf]
    %v182 = vld [vmem:[%s2 + $0x20] sm:$0xf]
    %v183 = vld [vmem:[%s2 + $0x24] sm:$0xf]
    %v184 = vld [vmem:[%s2 + $0x28] sm:$0xf]
    %v185 = vld [vmem:[%s2 + $0x2c] sm:$0xf]
    %v186 = vld [vmem:[%s2 + $0x30] sm:$0xf]
    %v187 = vld [vmem:[%s2 + $0x34] sm:$0xf]
    %v188 = vld [vmem:[%s2 + $0x38] sm:$0xf]
    %v189 = vld [vmem:[%s2 + $0x3c] sm:$0xf]
    %v206 = vunpack.c.l.b16 %v174
    %v207 = vunpack.c.l.b16 %v175
    %v208 = vunpack.c.l.b16 %v176
    %v209 = vunpack.c.l.b16 %v177
    %v210 = vunpack.c.l.b16 %v178
    %v211 = vunpack.c.l.b16 %v179
    %v212 = vunpack.c.l.b16 %v180
    %v213 = vunpack.c.l.b16 %v181
    %v214 = vunpack.c.l.b16 %v182
    %v215 = vunpack.c.l.b16 %v183
    %v216 = vunpack.c.l.b16 %v184
    %v217 = vunpack.c.l.b16 %v185
    %v218 = vunpack.c.l.b16 %v186
    %v219 = vunpack.c.l.b16 %v187
    %v220 = vunpack.c.l.b16 %v188
    %v221 = vunpack.c.l.b16 %v189
    %v222 = vpack.c.b16 %v207, %v206
    %v223 = vpack.c.b16 %v209, %v208
    %v224 = vpack.c.b16 %v211, %v210
    %v225 = vpack.c.b16 %v213, %v212
    %v226 = vpack.c.b16 %v215, %v214
    %v227 = vpack.c.b16 %v217, %v216
    %v228 = vpack.c.b16 %v219, %v218
    %v229 = vpack.c.b16 %v221, %v220
    %238 = vmatprep.subr.bf16.mxu0 0
    %239 = vmatpush1.bf16.msra.mxu0 %v222
    %240 = vmatprep.subr.bf16.mxu0 0
    %241 = vmatpush1.bf16.msra.mxu0 %v223
    %242 = vmatprep.subr.bf16.mxu0 0
    %243 = vmatpush1.bf16.msra.mxu0 %v224
    %244 = vmatprep.subr.bf16.mxu0 0
    %245 = vmatpush1.bf16.msra.mxu0 %v225
    %246 = vmatprep.subr.bf16.mxu0 0
    %247 = vmatpush1.bf16.msra.mxu0 %v226
    %248 = vmatprep.subr.bf16.mxu0 0
    %249 = vmatpush1.bf16.msra.mxu0 %v227
    %250 = vmatprep.subr.bf16.mxu0 0
    %251 = vmatpush1.bf16.msra.mxu0 %v228
    %252 = vmatprep.subr.bf16.mxu0 0
    %253 = vmatpush1.bf16.msra.mxu0 %v229
    %254 = vmatprep.subr.bf16.mxu0 0
    %255 = vmatpush1.bf16.msra.mxu0 0
    %256 = vmatprep.subr.bf16.mxu0 0
    %257 = vmatpush1.bf16.msra.mxu0 0
    %258 = vmatprep.subr.bf16.mxu0 0
    %259 = vmatpush1.bf16.msra.mxu0 0
    %260 = vmatprep.subr.bf16.mxu0 0
    %261 = vmatpush1.bf16.msra.mxu0 0
    %262 = vmatprep.subr.bf16.mxu0 0
    %263 = vmatpush1.bf16.msra.mxu0 0
    %264 = vmatprep.subr.bf16.mxu0 0
    %265 = vmatpush1.bf16.msra.mxu0 0
    %266 = vmatprep.subr.bf16.mxu0 0
    %267 = vmatpush1.bf16.msra.mxu0 0
    %268 = vmatprep.subr.bf16.mxu0 0
    %269 = vmatpush1.bf16.msra.mxu0 0
    %270 = vmatprep.mubr.bf16.mxu0 0
    %271 = vmatmul.mubr.bf16.gmra.mrb[0].mxu0 %v173
    %v272 = vpop.f32.mrb[0].mxu0
    %v273 = vadd.f32 0.0, %v272
    %v274 = vpop.f32.mrb[0].mxu0
    %v275 = vpop.f32.mrb[0].mxu0
    %v276 = vpop.f32.mrb[0].mxu0
    %277 = vdwg.mxu0
    %v278 = vld [vmem:[%s6 + $0x2] sm:$0x1]
    %v279 = vld [vmem:[%s6 + $0x3] sm:$0x1]
    %v280 = vrot.slane %v273, 4
    %v281 = vadd.f32 %v273, %v280
    %v282 = vrot.slane %v281, 2
    %v283 = vadd.f32 %v281, %v282
    %v284 = vrot.slane %v283, 1
    %v285 = vadd.f32 %v283, %v284
    %v286 = vmul.f32 %v285, 0.125
    %v287 = vmul.f32 %v273, %v273
    %v288 = vrot.slane %v287, 4
    %v289 = vadd.f32 %v287, %v288
    %v290 = vrot.slane %v289, 2
    %v291 = vadd.f32 %v289, %v290
    %v292 = vrot.slane %v291, 1
    %v293 = vadd.f32 %v291, %v292
    %v294 = vmul.f32 %v293, 0.125
    %v295 = vmul.f32 %v286, %v286
    %v296 = vsub.f32 %v294, %v295
    %v297 = vmax.f32 %v296, 0.0
    %v298 = vadd.f32 %v297, 1e-05
    %v299 = vrsqrt.pop %v298
    %v300 = vmul.f32 %v278, %v299
    %v301 = vmul.f32 %v286, %v300
    %v302 = vsub.f32 %v279, %v301
    %v304 = vlaneseq
    %v305 = vshrl.u32 %v304, 7
    %v306 = vsub.s32 0, %v305
    %v307 = vrot.slane %v300, %v306
    %v309 = vmul.f32 %v273, %v307
    %v311 = vlaneseq
    %v312 = vshrl.u32 %v311, 7
    %v313 = vsub.s32 0, %v312
    %v314 = vrot.slane %v302, %v313
    %v316 = vadd.f32 %v309, %v314
    %v317 = vmax.f32 %v316, 0.0
    %v318 = vpack.c.bf16 %v317, %v317
    %v319 = vld [vmem:[%s3] sm:$0xf]
    %v320 = vld [vmem:[%s3 + $0x4] sm:$0xf]
    %v321 = vld [vmem:[%s3 + $0x8] sm:$0xf]
    %v322 = vld [vmem:[%s3 + $0xc] sm:$0xf]
    %v323 = vld [vmem:[%s3 + $0x10] sm:$0xf]
    %v324 = vld [vmem:[%s3 + $0x14] sm:$0xf]
    %v325 = vld [vmem:[%s3 + $0x18] sm:$0xf]
    %v326 = vld [vmem:[%s3 + $0x1c] sm:$0xf]
    %v327 = vld [vmem:[%s3 + $0x20] sm:$0xf]
    %v328 = vld [vmem:[%s3 + $0x24] sm:$0xf]
    %v329 = vld [vmem:[%s3 + $0x28] sm:$0xf]
    %v330 = vld [vmem:[%s3 + $0x2c] sm:$0xf]
    %v331 = vld [vmem:[%s3 + $0x30] sm:$0xf]
    %v332 = vld [vmem:[%s3 + $0x34] sm:$0xf]
    %v333 = vld [vmem:[%s3 + $0x38] sm:$0xf]
    %v334 = vld [vmem:[%s3 + $0x3c] sm:$0xf]
    %v351 = vunpack.c.l.b16 %v319
    %v352 = vunpack.c.l.b16 %v320
    %v353 = vunpack.c.l.b16 %v321
    %v354 = vunpack.c.l.b16 %v322
    %v355 = vunpack.c.l.b16 %v323
    %v356 = vunpack.c.l.b16 %v324
    %v357 = vunpack.c.l.b16 %v325
    %v358 = vunpack.c.l.b16 %v326
    %v359 = vunpack.c.l.b16 %v327
    %v360 = vunpack.c.l.b16 %v328
    %v361 = vunpack.c.l.b16 %v329
    %v362 = vunpack.c.l.b16 %v330
    %v363 = vunpack.c.l.b16 %v331
    %v364 = vunpack.c.l.b16 %v332
    %v365 = vunpack.c.l.b16 %v333
    %v366 = vunpack.c.l.b16 %v334
    %v367 = vpack.c.b16 %v352, %v351
    %v368 = vpack.c.b16 %v354, %v353
    %v369 = vpack.c.b16 %v356, %v355
    %v370 = vpack.c.b16 %v358, %v357
    %v371 = vpack.c.b16 %v360, %v359
    %v372 = vpack.c.b16 %v362, %v361
    %v373 = vpack.c.b16 %v364, %v363
    %v374 = vpack.c.b16 %v366, %v365
    %383 = vmatprep.subr.bf16.mxu0 0
    %384 = vmatpush1.bf16.msra.mxu0 %v367
    %385 = vmatprep.subr.bf16.mxu0 0
    %386 = vmatpush1.bf16.msra.mxu0 %v368
    %387 = vmatprep.subr.bf16.mxu0 0
    %388 = vmatpush1.bf16.msra.mxu0 %v369
    %389 = vmatprep.subr.bf16.mxu0 0
    %390 = vmatpush1.bf16.msra.mxu0 %v370
    %391 = vmatprep.subr.bf16.mxu0 0
    %392 = vmatpush1.bf16.msra.mxu0 %v371
    %393 = vmatprep.subr.bf16.mxu0 0
    %394 = vmatpush1.bf16.msra.mxu0 %v372
    %395 = vmatprep.subr.bf16.mxu0 0
    %396 = vmatpush1.bf16.msra.mxu0 %v373
    %397 = vmatprep.subr.bf16.mxu0 0
    %398 = vmatpush1.bf16.msra.mxu0 %v374
    %399 = vmatprep.subr.bf16.mxu0 0
    %400 = vmatpush1.bf16.msra.mxu0 0
    %401 = vmatprep.subr.bf16.mxu0 0
    %402 = vmatpush1.bf16.msra.mxu0 0
    %403 = vmatprep.subr.bf16.mxu0 0
    %404 = vmatpush1.bf16.msra.mxu0 0
    %405 = vmatprep.subr.bf16.mxu0 0
    %406 = vmatpush1.bf16.msra.mxu0 0
    %407 = vmatprep.subr.bf16.mxu0 0
    %408 = vmatpush1.bf16.msra.mxu0 0
    %409 = vmatprep.subr.bf16.mxu0 0
    %410 = vmatpush1.bf16.msra.mxu0 0
    %411 = vmatprep.subr.bf16.mxu0 0
    %412 = vmatpush1.bf16.msra.mxu0 0
    %413 = vmatprep.subr.bf16.mxu0 0
    %414 = vmatpush1.bf16.msra.mxu0 0
    %415 = vmatprep.mubr.bf16.mxu0 0
    %416 = vmatmul.mubr.bf16.gmra.mrb[0].mxu0 %v318
    %v417 = vpop.f32.mrb[0].mxu0
    %v418 = vadd.f32 0.0, %v417
    %v419 = vpop.f32.mrb[0].mxu0
    %v420 = vpop.f32.mrb[0].mxu0
    %v421 = vpop.f32.mrb[0].mxu0
    %422 = vdwg.mxu0
    %v423 = vld [vmem:[%s6 + $0x4] sm:$0x1]
    %v424 = vld [vmem:[%s6 + $0x5] sm:$0x1]
    %v425 = vrot.slane %v418, 4
    %v426 = vadd.f32 %v418, %v425
    %v427 = vrot.slane %v426, 2
    %v428 = vadd.f32 %v426, %v427
    %v429 = vrot.slane %v428, 1
    %v430 = vadd.f32 %v428, %v429
    %v431 = vmul.f32 %v430, 0.125
    %v432 = vmul.f32 %v418, %v418
    %v433 = vrot.slane %v432, 4
    %v434 = vadd.f32 %v432, %v433
    %v435 = vrot.slane %v434, 2
    %v436 = vadd.f32 %v434, %v435
    %v437 = vrot.slane %v436, 1
    %v438 = vadd.f32 %v436, %v437
    %v439 = vmul.f32 %v438, 0.125
    %v440 = vmul.f32 %v431, %v431
    %v441 = vsub.f32 %v439, %v440
    %v442 = vmax.f32 %v441, 0.0
    %v443 = vadd.f32 %v442, 1e-05
    %v444 = vrsqrt.pop %v443
    %v445 = vmul.f32 %v423, %v444
    %v446 = vmul.f32 %v431, %v445
    %v447 = vsub.f32 %v424, %v446
    %v449 = vlaneseq
    %v450 = vshrl.u32 %v449, 7
    %v451 = vsub.s32 0, %v450
    %v452 = vrot.slane %v445, %v451
    %v454 = vmul.f32 %v418, %v452
    %v456 = vlaneseq
    %v457 = vshrl.u32 %v456, 7
    %v458 = vsub.s32 0, %v457
    %v459 = vrot.slane %v447, %v458
    %v461 = vadd.f32 %v454, %v459
    %v462 = vmax.f32 %v461, 0.0
    %v463 = vpack.c.bf16 %v462, %v462
    %v464 = vld [vmem:[%s4] sm:$0xff]
    %v465 = vld [vmem:[%s4 + $0x8] sm:$0xff]
    %v466 = vld [vmem:[%s4 + $0x10] sm:$0xff]
    %v467 = vld [vmem:[%s4 + $0x18] sm:$0xff]
    %v468 = vld [vmem:[%s4 + $0x20] sm:$0xff]
    %v469 = vld [vmem:[%s4 + $0x28] sm:$0xff]
    %v470 = vld [vmem:[%s4 + $0x30] sm:$0xff]
    %v471 = vld [vmem:[%s4 + $0x38] sm:$0xff]
    %v472 = vld [vmem:[%s4 + $0x40] sm:$0xff]
    %v473 = vld [vmem:[%s4 + $0x48] sm:$0xff]
    %v474 = vld [vmem:[%s4 + $0x50] sm:$0xff]
    %v475 = vld [vmem:[%s4 + $0x58] sm:$0xff]
    %v476 = vld [vmem:[%s4 + $0x60] sm:$0xff]
    %v477 = vld [vmem:[%s4 + $0x68] sm:$0xff]
    %v478 = vld [vmem:[%s4 + $0x70] sm:$0xff]
    %v479 = vld [vmem:[%s4 + $0x78] sm:$0xff]
    %v496 = vunpack.c.l.b16 %v464
    %v497 = vunpack.c.h.b16 %v464
    %v498 = vunpack.c.l.b16 %v465
    %v499 = vunpack.c.h.b16 %v465
    %v500 = vunpack.c.l.b16 %v466
    %v501 = vunpack.c.h.b16 %v466
    %v502 = vunpack.c.l.b16 %v467
    %v503 = vunpack.c.h.b16 %v467
    %v504 = vunpack.c.l.b16 %v468
    %v505 = vunpack.c.h.b16 %v468
    %v506 = vunpack.c.l.b16 %v469
    %v507 = vunpack.c.h.b16 %v469
    %v508 = vunpack.c.l.b16 %v470
    %v509 = vunpack.c.h.b16 %v470
    %v510 = vunpack.c.l.b16 %v471
    %v511 = vunpack.c.h.b16 %v471
    %v512 = vunpack.c.l.b16 %v472
    %v513 = vunpack.c.h.b16 %v472
    %v514 = vunpack.c.l.b16 %v473
    %v515 = vunpack.c.h.b16 %v473
    %v516 = vunpack.c.l.b16 %v474
    %v517 = vunpack.c.h.b16 %v474
    %v518 = vunpack.c.l.b16 %v475
    %v519 = vunpack.c.h.b16 %v475
    %v520 = vunpack.c.l.b16 %v476
    %v521 = vunpack.c.h.b16 %v476
    %v522 = vunpack.c.l.b16 %v477
    %v523 = vunpack.c.h.b16 %v477
    %v524 = vunpack.c.l.b16 %v478
    %v525 = vunpack.c.h.b16 %v478
    %v526 = vunpack.c.l.b16 %v479
    %v527 = vunpack.c.h.b16 %v479
    %v528 = vpack.c.b16 %v498, %v496
    %v529 = vpack.c.b16 %v499, %v497
    %v530 = vpack.c.b16 %v502, %v500
    %v531 = vpack.c.b16 %v503, %v501
    %v532 = vpack.c.b16 %v506, %v504
    %v533 = vpack.c.b16 %v507, %v505
    %v534 = vpack.c.b16 %v510, %v508
    %v535 = vpack.c.b16 %v511, %v509
    %v536 = vpack.c.b16 %v514, %v512
    %v537 = vpack.c.b16 %v515, %v513
    %v538 = vpack.c.b16 %v518, %v516
    %v539 = vpack.c.b16 %v519, %v517
    %v540 = vpack.c.b16 %v522, %v520
    %v541 = vpack.c.b16 %v523, %v521
    %v542 = vpack.c.b16 %v526, %v524
    %v543 = vpack.c.b16 %v527, %v525
    %560 = vmatprep.subr.bf16.mxu0 %v529
    %561 = vmatpush1.bf16.msra.mxu0 %v528
    %562 = vmatprep.subr.bf16.mxu0 %v531
    %563 = vmatpush1.bf16.msra.mxu0 %v530
    %564 = vmatprep.subr.bf16.mxu0 %v533
    %565 = vmatpush1.bf16.msra.mxu0 %v532
    %566 = vmatprep.subr.bf16.mxu0 %v535
    %567 = vmatpush1.bf16.msra.mxu0 %v534
    %568 = vmatprep.subr.bf16.mxu0 %v537
    %569 = vmatpush1.bf16.msra.mxu0 %v536
    %570 = vmatprep.subr.bf16.mxu0 %v539
    %571 = vmatpush1.bf16.msra.mxu0 %v538
    %572 = vmatprep.subr.bf16.mxu0 %v541
    %573 = vmatpush1.bf16.msra.mxu0 %v540
    %574 = vmatprep.subr.bf16.mxu0 %v543
    %575 = vmatpush1.bf16.msra.mxu0 %v542
    %576 = vmatprep.subr.bf16.mxu0 0
    %577 = vmatpush1.bf16.msra.mxu0 0
    %578 = vmatprep.subr.bf16.mxu0 0
    %579 = vmatpush1.bf16.msra.mxu0 0
    %580 = vmatprep.subr.bf16.mxu0 0
    %581 = vmatpush1.bf16.msra.mxu0 0
    %582 = vmatprep.subr.bf16.mxu0 0
    %583 = vmatpush1.bf16.msra.mxu0 0
    %584 = vmatprep.subr.bf16.mxu0 0
    %585 = vmatpush1.bf16.msra.mxu0 0
    %586 = vmatprep.subr.bf16.mxu0 0
    %587 = vmatpush1.bf16.msra.mxu0 0
    %588 = vmatprep.subr.bf16.mxu0 0
    %589 = vmatpush1.bf16.msra.mxu0 0
    %590 = vmatprep.subr.bf16.mxu0 0
    %591 = vmatpush1.bf16.msra.mxu0 0
    %592 = vmatprep.mubr.bf16.mxu0 0
    %593 = vmatmul.mubr.bf16.gmra.mrb[0].mxu0 %v463
    %v594 = vpop.f32.mrb[0].mxu0
    %v595 = vadd.f32 0.0, %v594
    %v596 = vpop.f32.mrb[0].mxu0
    %v597 = vadd.f32 0.0, %v596
    %v598 = vpop.f32.mrb[0].mxu0
    %v599 = vpop.f32.mrb[0].mxu0
    %600 = vdwg.mxu0
    %v601 = vld [vmem:[%s6 + $0x6] sm:$0x3]
    %v602 = vld [vmem:[%s6 + $0x8] sm:$0x3]
    %v603 = vrot.slane %v595, 4
    %v604 = vadd.f32 %v595, %v603
    %v605 = vrot.slane %v604, 2
    %v606 = vadd.f32 %v604, %v605
    %v607 = vrot.slane %v606, 1
    %v608 = vadd.f32 %v606, %v607
    %v609 = vrot.slane %v597, 4
    %v610 = vadd.f32 %v597, %v609
    %v611 = vrot.slane %v610, 2
    %v612 = vadd.f32 %v610, %v611
    %v613 = vrot.slane %v612, 1
    %v614 = vadd.f32 %v612, %v613
    %v615 = vmul.f32 %v608, 0.125
    %v616 = vmul.f32 %v614, 0.125
    %v617 = vmul.f32 %v595, %v595
    %v618 = vmul.f32 %v597, %v597
    %v619 = vrot.slane %v617, 4
    %v620 = vadd.f32 %v617, %v619
    %v621 = vrot.slane %v620, 2
    %v622 = vadd.f32 %v620, %v621
    %v623 = vrot.slane %v622, 1
    %v624 = vadd.f32 %v622, %v623
    %v625 = vrot.slane %v618, 4
    %v626 = vadd.f32 %v618, %v625
    %v627 = vrot.slane %v626, 2
    %v628 = vadd.f32 %v626, %v627
    %v629 = vrot.slane %v628, 1
    %v630 = vadd.f32 %v628, %v629
    %v631 = vmul.f32 %v624, 0.125
    %v632 = vmul.f32 %v630, 0.125
    %v633 = vmul.f32 %v615, %v615
    %v634 = vmul.f32 %v616, %v616
    %v635 = vsub.f32 %v631, %v633
    %v636 = vsub.f32 %v632, %v634
    %v637 = vmax.f32 %v635, 0.0
    %v638 = vmax.f32 %v636, 0.0
    %v639 = vadd.f32 %v637, 1e-05
    %v640 = vadd.f32 %v638, 1e-05
    %v641 = vrsqrt.pop %v639
    %v642 = vrsqrt.pop %v640
    %v645 = vcombine.low %v641, %v642
    %v647 = vunpack.c.l.s4 1966171168
    %v648 = vunpack.c.0.s8 %v647
    %v649 = vlaneseq
    %v650 = vshrl.u32 %v649, 7
    %v651 = vsub.s32 %v648, %v650
    %v652 = vrot.slane %v645, %v651
    %v654 = vunpack.c.l.s4 1966171168
    %v655 = vunpack.c.0.s8 %v654
    %v656 = vlaneseq
    %v657 = vshrl.u32 %v656, 7
    %v658 = vsub.s32 %v655, %v657
    %v659 = vrot.slane %v652, %v658
    %v661 = vmul.f32 %v601, %v659
    %v663 = vlaneseq
    %v664 = vshrl.u32 %v663, 7
    %v665 = vsub.s32 0, %v664
    %v666 = vrot.slane %v661, %v665
    %v667 = vlaneseq
    %v668 = vshrl.u32 %v667, 7
    %v669 = vsub.s32 1, %v668
    %v670 = vrot.slane %v661, %v669
    %v673 = vmul.f32 %v615, %v666
    %v674 = vmul.f32 %v616, %v670
    %v677 = vcombine.low %v673, %v674
    %v679 = vunpack.c.l.s4 1966171168
    %v680 = vunpack.c.0.s8 %v679
    %v681 = vlaneseq
    %v682 = vshrl.u32 %v681, 7
    %v683 = vsub.s32 %v680, %v682
    %v684 = vrot.slane %v677, %v683
    %v686 = vunpack.c.l.s4 1966171168
    %v687 = vunpack.c.0.s8 %v686
    %v688 = vlaneseq
    %v689 = vshrl.u32 %v688, 7
    %v690 = vsub.s32 %v687, %v689
    %v691 = vrot.slane %v684, %v690
    %v693 = vsub.f32 %v602, %v691
    %v694 = vmul.f32 %v595, %v666
    %v695 = vmul.f32 %v597, %v670
    %v697 = vlaneseq
    %v698 = vshrl.u32 %v697, 7
    %v699 = vsub.s32 0, %v698
    %v700 = vrot.slane %v693, %v699
    %v701 = vlaneseq
    %v702 = vshrl.u32 %v701, 7
    %v703 = vsub.s32 1, %v702
    %v704 = vrot.slane %v693, %v703
    %v707 = vadd.f32 %v694, %v700
    %v708 = vadd.f32 %v695, %v704
    %v709 = vmax.f32 %v707, 0.0
    %v710 = vmax.f32 %v708, 0.0
    %v711 = vpack.c.bf16 %v709, %v709
    %v712 = vpack.c.bf16 %v710, %v710
    %v713 = vld [vmem:[%s6 + $0xa] sm:$0x1]
    %v714 = vld [vmem:[%s5] sm:$0xf]
    %v715 = vld [vmem:[%s5 + $0x4] sm:$0xf]
    %v716 = vld [vmem:[%s5 + $0x8] sm:$0xf]
    %v717 = vld [vmem:[%s5 + $0xc] sm:$0xf]
    %v718 = vld [vmem:[%s5 + $0x10] sm:$0xf]
    %v719 = vld [vmem:[%s5 + $0x14] sm:$0xf]
    %v720 = vld [vmem:[%s5 + $0x18] sm:$0xf]
    %v721 = vld [vmem:[%s5 + $0x1c] sm:$0xf]
    %v722 = vld [vmem:[%s5 + $0x20] sm:$0xf]
    %v723 = vld [vmem:[%s5 + $0x24] sm:$0xf]
    %v724 = vld [vmem:[%s5 + $0x28] sm:$0xf]
    %v725 = vld [vmem:[%s5 + $0x2c] sm:$0xf]
    %v726 = vld [vmem:[%s5 + $0x30] sm:$0xf]
    %v727 = vld [vmem:[%s5 + $0x34] sm:$0xf]
    %v728 = vld [vmem:[%s5 + $0x38] sm:$0xf]
    %v729 = vld [vmem:[%s5 + $0x3c] sm:$0xf]
    %v730 = vld [vmem:[%s5 + $0x40] sm:$0xf]
    %v731 = vld [vmem:[%s5 + $0x44] sm:$0xf]
    %v732 = vld [vmem:[%s5 + $0x48] sm:$0xf]
    %v733 = vld [vmem:[%s5 + $0x4c] sm:$0xf]
    %v734 = vld [vmem:[%s5 + $0x50] sm:$0xf]
    %v735 = vld [vmem:[%s5 + $0x54] sm:$0xf]
    %v736 = vld [vmem:[%s5 + $0x58] sm:$0xf]
    %v737 = vld [vmem:[%s5 + $0x5c] sm:$0xf]
    %v738 = vld [vmem:[%s5 + $0x60] sm:$0xf]
    %v739 = vld [vmem:[%s5 + $0x64] sm:$0xf]
    %v740 = vld [vmem:[%s5 + $0x68] sm:$0xf]
    %v741 = vld [vmem:[%s5 + $0x6c] sm:$0xf]
    %v742 = vld [vmem:[%s5 + $0x70] sm:$0xf]
    %v743 = vld [vmem:[%s5 + $0x74] sm:$0xf]
    %v744 = vld [vmem:[%s5 + $0x78] sm:$0xf]
    %v745 = vld [vmem:[%s5 + $0x7c] sm:$0xf]
    %v747 = vlaneseq
    %v748 = vshrl.u32 %v747, 7
    %v749 = vsub.s32 0, %v748
    %v750 = vrot.slane %v713, %v749
    %v784 = vunpack.c.l.b16 %v714
    %v785 = vunpack.c.l.b16 %v715
    %v786 = vunpack.c.l.b16 %v716
    %v787 = vunpack.c.l.b16 %v717
    %v788 = vunpack.c.l.b16 %v718
    %v789 = vunpack.c.l.b16 %v719
    %v790 = vunpack.c.l.b16 %v720
    %v791 = vunpack.c.l.b16 %v721
    %v792 = vunpack.c.l.b16 %v722
    %v793 = vunpack.c.l.b16 %v723
    %v794 = vunpack.c.l.b16 %v724
    %v795 = vunpack.c.l.b16 %v725
    %v796 = vunpack.c.l.b16 %v726
    %v797 = vunpack.c.l.b16 %v727
    %v798 = vunpack.c.l.b16 %v728
    %v799 = vunpack.c.l.b16 %v729
    %v800 = vunpack.c.l.b16 %v730
    %v801 = vunpack.c.l.b16 %v731
    %v802 = vunpack.c.l.b16 %v732
    %v803 = vunpack.c.l.b16 %v733
    %v804 = vunpack.c.l.b16 %v734
    %v805 = vunpack.c.l.b16 %v735
    %v806 = vunpack.c.l.b16 %v736
    %v807 = vunpack.c.l.b16 %v737
    %v808 = vunpack.c.l.b16 %v738
    %v809 = vunpack.c.l.b16 %v739
    %v810 = vunpack.c.l.b16 %v740
    %v811 = vunpack.c.l.b16 %v741
    %v812 = vunpack.c.l.b16 %v742
    %v813 = vunpack.c.l.b16 %v743
    %v814 = vunpack.c.l.b16 %v744
    %v815 = vunpack.c.l.b16 %v745
    %v816 = vpack.c.b16 %v785, %v784
    %v817 = vpack.c.b16 %v787, %v786
    %v818 = vpack.c.b16 %v789, %v788
    %v819 = vpack.c.b16 %v791, %v790
    %v820 = vpack.c.b16 %v793, %v792
    %v821 = vpack.c.b16 %v795, %v794
    %v822 = vpack.c.b16 %v797, %v796
    %v823 = vpack.c.b16 %v799, %v798
    %v824 = vpack.c.b16 %v801, %v800
    %v825 = vpack.c.b16 %v803, %v802
    %v826 = vpack.c.b16 %v805, %v804
    %v827 = vpack.c.b16 %v807, %v806
    %v828 = vpack.c.b16 %v809, %v808
    %v829 = vpack.c.b16 %v811, %v810
    %v830 = vpack.c.b16 %v813, %v812
    %v831 = vpack.c.b16 %v815, %v814
    %848 = vmatprep.subr.bf16.mxu0 0
    %849 = vmatpush1.bf16.msra.mxu0 %v816
    %850 = vmatprep.subr.bf16.mxu0 0
    %851 = vmatpush1.bf16.msra.mxu0 %v817
    %852 = vmatprep.subr.bf16.mxu0 0
    %853 = vmatpush1.bf16.msra.mxu0 %v818
    %854 = vmatprep.subr.bf16.mxu0 0
    %855 = vmatpush1.bf16.msra.mxu0 %v819
    %856 = vmatprep.subr.bf16.mxu0 0
    %857 = vmatpush1.bf16.msra.mxu0 %v820
    %858 = vmatprep.subr.bf16.mxu0 0
    %859 = vmatpush1.bf16.msra.mxu0 %v821
    %860 = vmatprep.subr.bf16.mxu0 0
    %861 = vmatpush1.bf16.msra.mxu0 %v822
    %862 = vmatprep.subr.bf16.mxu0 0
    %863 = vmatpush1.bf16.msra.mxu0 %v823
    %864 = vmatprep.subr.bf16.mxu0 0
    %865 = vmatpush1.bf16.msra.mxu0 %v824
    %866 = vmatprep.subr.bf16.mxu0 0
    %867 = vmatpush1.bf16.msra.mxu0 %v825
    %868 = vmatprep.subr.bf16.mxu0 0
    %869 = vmatpush1.bf16.msra.mxu0 %v826
    %870 = vmatprep.subr.bf16.mxu0 0
    %871 = vmatpush1.bf16.msra.mxu0 %v827
    %872 = vmatprep.subr.bf16.mxu0 0
    %873 = vmatpush1.bf16.msra.mxu0 %v828
    %874 = vmatprep.subr.bf16.mxu0 0
    %875 = vmatpush1.bf16.msra.mxu0 %v829
    %876 = vmatprep.subr.bf16.mxu0 0
    %877 = vmatpush1.bf16.msra.mxu0 %v830
    %878 = vmatprep.subr.bf16.mxu0 0
    %879 = vmatpush1.bf16.msra.mxu0 %v831
    %880 = vmatprep.mubr.bf16.mxu0 %v712
    %881 = vmatmul.mubr.bf16.gmra.mrb[0].mxu0 %v711
    %v882 = vpop.f32.mrb[0].mxu0
    %v883 = vadd.f32 %v750, %v882
    %v884 = vpop.f32.mrb[0].mxu0
    %v885 = vpop.f32.mrb[0].mxu0
    %v886 = vpop.f32.mrb[0].mxu0
    %887 = vdwg.mxu0
    %v888 = vsub.f32 0.0, %v883
    %v889 = vmul.f32 %v888, 1.442695
    %v890 = vpow.pop %v889
    %v891 = vadd.f32 %v890, 1.0
    %v892 = vrcp.pop %v891
    %893 = vst [vmem:[#allocation2] sm:$0xff] %v892
    // Predicated region
    $region30: #{ffgenerator_forward.1} parent=1 // pred_check
      _
    $region31: #{ffgenerator_forward.1} parent=1 // pred_check_branch
      %895 = sbr.rel (0) target = $region33
    $region32: #{ffgenerator_forward.1} parent=1 // pred_region
      %s897 = ssub.s32 128, 128
      %898 = vsyncadd [#allocation3], %s897
      %s900 = sshll.u32 [#allocation2], 4
      %s901 = int_to_ptr.vmem [resolvable:$true] %s900
      %903 = dma.vmem_to_hbm [thread:$0]  %s901, 128, %s7, [#allocation3]
    $region33: #{ffgenerator_forward.1} parent=1 // pred_fallthru
      _
    // Predicated region
    $region34: #{ffgenerator_forward.1} parent=1 // pred_check
      _
    $region35: #{ffgenerator_forward.1} parent=1 // pred_check_branch
      %905 = sbr.rel (0) target = $region37
    $region36: #{ffgenerator_forward.1} parent=1 // pred_region
      %906 = dma.done [#allocation3], 128
    $region37: #{ffgenerator_forward.1} parent=1 // pred_fallthru
      _
    %907 = vsyncpa [#allocation3], 1

</llo_original>
